<compile_context>
chip_gen: v5e
topology: v5e:2x2
jax: 0.10.0
libtpu: 0.0.40
codegen_flags: <defaults>
</compile_context>

<pallas_src>
import jax
import jax.numpy as jnp
from jax.experimental import pallas as pl
from jax.experimental.pallas import tpu as pltpu

NEG_LIMIT = float(jnp.finfo(jnp.float32).min)


def _round_up(x, m):
    return (x + m - 1) // m * m


def _first_n_last_kernel(meta_ref, tok_ref, ws_ref, we_ref, b_ref, o_ref,
                         proj_ref):
    """Grid = (batch, span_tile).

    meta_ref: (1, TN, 3) i32   [...,0]=start, [...,1]=end (inclusive), [...,2]=valid
    tok_ref:  (1, Sp, Hp)      token reps in mxu dtype (constant along span tiles)
    ws_ref:   (Hp, Hp)         projection weight, start half (mxu dtype)
    we_ref:   (Hp, Hp)         projection weight, end half   (mxu dtype)
    b_ref:    (1, Hp)  f32     projection bias
    o_ref:    (1, TN, Hp)      output span reps
    proj_ref: (2*Sp, Hp)       VMEM scratch: [ tok@W_start ; tok@W_end ]
    """
    nt = pl.program_id(1)
    sp = tok_ref.shape[1]

    # Project the token block once per batch element.  The span-tile axis is
    # the inner "arbitrary" grid axis, so the scratch persists across its steps
    # regardless of how the outer "parallel" batch axis is sharded over cores.
    @pl.when(nt == 0)
    def _():
        tok = tok_ref[0]                                            # (Sp, Hp)
        proj_ref[pl.ds(0, sp), :] = jnp.dot(
            tok, ws_ref[...], preferred_element_type=jnp.float32
        ).astype(proj_ref.dtype)
        proj_ref[pl.ds(sp, sp), :] = jnp.dot(
            tok, we_ref[...], preferred_element_type=jnp.float32
        ).astype(proj_ref.dtype)

    meta = meta_ref[0]                                              # (TN, 3)
    starts = meta[:, 0:1]                                           # (TN, 1)
    ends = meta[:, 1:2]                                             # (TN, 1) inclusive
    valid = meta[:, 2:3] != 0                                       # (TN, 1) bool

    tn = meta.shape[0]
    # Fused one-hot over the stacked [start ; end] projection rows: lane j < Sp
    # selects (tok@W_start)[j]; lane j >= Sp selects (tok@W_end)[j-Sp].  `valid`
    # is folded in so masked/padded spans contribute only the bias.
    # (Per-step iota regeneration is ~1 VPU op per vreg; staging it in scratch
    #  was judged not worth the extra VMEM.)
    rng = jax.lax.broadcasted_iota(jnp.int32, (tn, 2 * sp), 1)
    onehot = (((rng == starts) | (rng == ends + sp)) & valid).astype(proj_ref.dtype)

    out = jnp.dot(onehot, proj_ref[...],
                  preferred_element_type=jnp.float32) + b_ref[...]  # (TN, Hp)
    o_ref[0] = out.astype(o_ref.dtype)


def _pick_block_n(n_padded):
    # n_padded is a multiple of 128; prefer big span tiles (amortize the
    # ~0.35 us per-grid-step cost, fill the MXU M dimension) but cap them so
    # the (TN, Hp) f32 output block stays VMEM-friendly.
    for cand in (512, 256, 128):
        if n_padded % cand == 0:
            return cand
    return n_padded


def first_n_last(token_reps, span_ids, span_masks, w, b, *,
                 block_n=None, mxu_dtype=jnp.bfloat16):
    """Pallas implementation of First_n_Last.forward (mode='start_end', alpha=1).

    token_reps: (B, S, H) float
    span_ids:   (B, N, 2) int    [start, end+1)
    span_masks: (B, N)    bool
    w:          (2H, H)   float  Linear weight (applied as x @ w)
    b:          (H,)      float  Linear bias
    """
    B, S, H = token_reps.shape
    N = span_ids.shape[1]
    assert w.shape == (2 * H, H) and b.shape == (H,)
    out_dtype = token_reps.dtype

    # ---- layout padding (lane-dense output, aligned scratch, large tiles) ----
    Sp = _round_up(S, 16)
    Hp = _round_up(H, 128)
    Np = _round_up(N, 128)
    if block_n is None:
        block_n = _pick_block_n(Np)
    Np = _round_up(Np, block_n)
    n_tiles = Np // block_n

    # ---- wrapper-side operand plumbing ----
    starts = span_ids[..., 0].astype(jnp.int32)
    ends = span_ids[..., 1].astype(jnp.int32) - 1                  # inclusive
    valid = span_masks.astype(jnp.int32)
    meta = jnp.stack([starts, ends, valid], axis=-1)               # (B, N, 3)
    meta = jnp.pad(meta, ((0, 0), (0, Np - N), (0, 0)))            # padded spans invalid

    tok = jnp.pad(token_reps, ((0, 0), (0, Sp - S), (0, Hp - H))).astype(mxu_dtype)
    w_start = jnp.pad(w[:H, :], ((0, Hp - H), (0, Hp - H))).astype(mxu_dtype)
    w_end = jnp.pad(w[H:, :], ((0, Hp - H), (0, Hp - H))).astype(mxu_dtype)
    bias = jnp.pad(b, (0, Hp - H)).astype(jnp.float32).reshape(1, Hp)

    # ---- VMEM budget + cost hint ----
    msz = jnp.dtype(mxu_dtype).itemsize
    footprint = (
        2 * (Sp * Hp * msz)              # tok block (double-buffered)
        + 2 * (block_n * 128 * 4)        # meta block (lane-padded, double-buffered)
        + 2 * 2 * (Hp * Hp * msz)        # W_start + W_end (double-buffered; DMA'd once)
        + 2 * (8 * Hp * 4)               # bias
        + 2 * (block_n * Hp * 4)         # output block (double-buffered)
        + (2 * Sp * Hp * msz)            # projection scratch
    )
    vmem_limit = int(min(max(footprint * 1.5, 32 * 1024 * 1024), 96 * 1024 * 1024))

    flops = 2 * B * (2 * Sp * Hp * Hp) + 2 * B * Np * (2 * Sp) * Hp
    bytes_accessed = int(B * Sp * Hp * msz + B * Np * 3 * 4 + 2 * Hp * Hp * msz
                         + Hp * 4 + B * Np * Hp * jnp.dtype(out_dtype).itemsize)

    out = pl.pallas_call(
        _first_n_last_kernel,
        out_shape=jax.ShapeDtypeStruct((B, Np, Hp), out_dtype),
        grid=(B, n_tiles),
        in_specs=[
            pl.BlockSpec((1, block_n, 3), lambda i, j: (i, j, 0)),   # meta
            pl.BlockSpec((1, Sp, Hp), lambda i, j: (i, 0, 0)),       # token reps
            # W/B are grid-invariant (DMA'd once).  For very large H on v7x
            # (64 MiB VMEM) either tile Hp or single-buffer them
            # (pipeline_mode=pl.Buffered(1)); left default here for portability.
            pl.BlockSpec((Hp, Hp), lambda i, j: (0, 0)),             # W_start
            pl.BlockSpec((Hp, Hp), lambda i, j: (0, 0)),             # W_end
            pl.BlockSpec((1, Hp), lambda i, j: (0, 0)),              # bias
        ],
        out_specs=pl.BlockSpec((1, block_n, Hp), lambda i, j: (i, j, 0)),
        scratch_shapes=[
            pltpu.VMEM((2 * Sp, Hp), mxu_dtype),                     # [tok@Ws ; tok@We]
        ],
        compiler_params=pltpu.CompilerParams(
            dimension_semantics=("parallel", "arbitrary"),
            vmem_limit_bytes=vmem_limit),
        cost_estimate=pl.CostEstimate(flops=flops, transcendentals=0,
                                      bytes_accessed=bytes_accessed),
    )(meta, tok, w_start, w_end, bias)

    return out[:, :N, :H]


def _reference(token_reps, span_ids, span_masks, w, b, neg_limit=NEG_LIMIT):
    """Plain-JAX transliteration of extract_span_reps(start_end) + Linear."""
    S = token_reps.shape[1]
    starts = span_ids[..., 0]
    ends = span_ids[..., 1] - 1
    rng = jnp.arange(S).reshape(1, 1, -1)
    sm = ((rng >= starts[..., None]) & (rng <= starts[..., None])
          & span_masks[..., None])[..., None]
    em = ((rng <= ends[..., None]) & (rng >= ends[..., None])
          & span_masks[..., None])[..., None]
    tok = token_reps[:, None]
    sr = jnp.max(jnp.where(sm, tok, neg_limit), axis=2)
    er = jnp.max(jnp.where(em, tok, neg_limit), axis=2)
    cat = jnp.concatenate([sr, er], axis=-1)
    cat = jnp.where(span_masks[..., None], cat, 0.0)
    return cat @ w + b


if __name__ == "__main__":
    key = jax.random.PRNGKey(0)
    B, S, H, max_span_width = 2, 8, 32, 4
    N = S * max_span_width            # num_spans = seq_len * max_span_width

    k_tok, k_w, k_b = jax.random.split(key, 3)
    token_reps = jax.random.normal(k_tok, (B, S, H), dtype=jnp.float32)

    # Deterministic parameter init for ProjectionLayer (Linear 2H -> H).
    w = jax.random.normal(k_w, (2 * H, H), dtype=jnp.float32) * (1.0 / jnp.sqrt(2 * H))
    b = jax.random.normal(k_b, (H,), dtype=jnp.float32) * 0.02

    # Build span ids: for each start position i and width ww in [1, W]: [i, i+ww)
    pos = jnp.arange(S, dtype=jnp.int32)
    width = jnp.arange(1, max_span_width + 1, dtype=jnp.int32)
    starts = jnp.repeat(pos, max_span_width)                       # (N,)
    ends = (pos[:, None] + width[None, :]).reshape(-1)             # (N,)
    seq_lens = jnp.array([S, S - 2], dtype=jnp.int32)              # per-batch lengths
    span_masks = ends[None, :] <= seq_lens[:, None]                # (B, N) bool
    ends_c = jnp.minimum(ends, S)
    span_ids = jnp.broadcast_to(
        jnp.stack([starts, ends_c], axis=-1)[None], (B, N, 2)).astype(jnp.int32)

    ref = _reference(token_reps, span_ids, span_masks, w, b)

    # Fast bf16-MXU path (default): tolerance reflects bf16 operand rounding.
    out_bf16 = jax.block_until_ready(
        first_n_last(token_reps, span_ids, span_masks, w, b))
    assert out_bf16.shape == (B, N, H)
    assert jnp.allclose(out_bf16, ref, atol=3e-2, rtol=3e-2), "bf16 path mismatch"

    # Full-precision path.
    out_f32 = jax.block_until_ready(
        first_n_last(token_reps, span_ids, span_masks, w, b,
                     mxu_dtype=jnp.float32))
    assert out_f32.shape == (B, N, H)
    assert jnp.allclose(out_f32, ref, atol=1e-3, rtol=1e-3), "f32 path mismatch"

    print("KERNEL_OK")
</pallas_src>

<mosaic_0001>
module attributes {stable_mosaic.version = 11 : i64} {
  func.func @_first_n_last_kernel(%arg0: i32, %arg1: i32, %arg2: memref<1x128x3xi32, #tpu.memory_space<vmem>>, %arg3: memref<1x16x128xbf16, #tpu.memory_space<vmem>>, %arg4: memref<128x128xbf16, #tpu.memory_space<vmem>>, %arg5: memref<128x128xbf16, #tpu.memory_space<vmem>>, %arg6: memref<1x128xf32, #tpu.memory_space<vmem>>, %arg7: memref<1x128x128xf32, #tpu.memory_space<vmem>>, %arg8: memref<32x128xbf16, #tpu.memory_space<vmem>>) attributes {dimension_semantics = [#tpu.dimension_semantics<parallel>, #tpu.dimension_semantics<arbitrary>], iteration_bounds = array<i64: 2, 1>, scalar_prefetch = 0 : i64, scratch_operands = 1 : i64, tpu.core_type = #tpu.core_type<tc>, window_params = [{transform_indices = @transform_0, window_bounds = array<i64: 1, 128, 3>}, {transform_indices = @transform_1, window_bounds = array<i64: 1, 16, 128>}, {pipeline_mode = #tpu.pipeline_mode<synchronous>, transform_indices = @transform_2, window_bounds = array<i64: 128, 128>}, {pipeline_mode = #tpu.pipeline_mode<synchronous>, transform_indices = @transform_3, window_bounds = array<i64: 128, 128>}, {pipeline_mode = #tpu.pipeline_mode<synchronous>, transform_indices = @transform_4, window_bounds = array<i64: 1, 128>}, {transform_indices = @transform_5, window_bounds = array<i64: 1, 128, 128>}]} {
    %c0_i32 = arith.constant 0 : i32
    %0 = arith.cmpi eq, %arg1, %c0_i32 : i32
    %1 = arith.extui %0 : i1 to i32
    %c0_i32_0 = arith.constant 0 : i32
    %2 = arith.cmpi ne, %1, %c0_i32_0 : i32
    scf.if %2 {
      %c0_11 = arith.constant 0 : index
      %c0_12 = arith.constant 0 : index
      %c0_13 = arith.constant 0 : index
      %31 = vector.load %arg3[%c0_11, %c0_12, %c0_13] : memref<1x16x128xbf16, #tpu.memory_space<vmem>>, vector<1x16x128xbf16>
      %32 = vector.shape_cast %31 : vector<1x16x128xbf16> to vector<16x128xbf16>
      %c0_14 = arith.constant 0 : index
      %c0_15 = arith.constant 0 : index
      %33 = vector.load %arg4[%c0_14, %c0_15] : memref<128x128xbf16, #tpu.memory_space<vmem>>, vector<128x128xbf16>
      %cst_16 = arith.constant dense<0.000000e+00> : vector<16x128xf32>
      %34 = tpu.matmul %32, %33, %cst_16 {dimension_numbers = #tpu.dot_dimension_numbers<[1], [0], [0], [1], [0, 0, 1, 1], [], []>} : vector<16x128xbf16>, vector<128x128xbf16>, vector<16x128xf32> -> vector<16x128xf32>
      %35 = arith.truncf %34 : vector<16x128xf32> to vector<16x128xbf16>
      %c0_17 = arith.constant 0 : index
      %c0_18 = arith.constant 0 : index
      %36 = vector.load %arg8[%c0_17, %c0_18] : memref<32x128xbf16, #tpu.memory_space<vmem>>, vector<16x128xbf16>
      tpu.vector_store %arg8[%c0_17, %c0_18], %35 {strides = array<i32>} : memref<32x128xbf16, #tpu.memory_space<vmem>>, vector<16x128xbf16>,
      %c0_19 = arith.constant 0 : index
      %c0_20 = arith.constant 0 : index
      %37 = vector.load %arg5[%c0_19, %c0_20] : memref<128x128xbf16, #tpu.memory_space<vmem>>, vector<128x128xbf16>
      %cst_21 = arith.constant dense<0.000000e+00> : vector<16x128xf32>
      %38 = tpu.matmul %32, %37, %cst_21 {dimension_numbers = #tpu.dot_dimension_numbers<[1], [0], [0], [1], [0, 0, 1, 1], [], []>} : vector<16x128xbf16>, vector<128x128xbf16>, vector<16x128xf32> -> vector<16x128xf32>
      %39 = arith.truncf %38 : vector<16x128xf32> to vector<16x128xbf16>
      %c16 = arith.constant 16 : index
      %c0_22 = arith.constant 0 : index
      %40 = vector.load %arg8[%c16, %c0_22] : memref<32x128xbf16, #tpu.memory_space<vmem>>, vector<16x128xbf16>
      tpu.vector_store %arg8[%c16, %c0_22], %39 {strides = array<i32>} : memref<32x128xbf16, #tpu.memory_space<vmem>>, vector<16x128xbf16>,
    } else {
    }
    %c0 = arith.constant 0 : index
    %c0_1 = arith.constant 0 : index
    %c0_2 = arith.constant 0 : index
    %3 = vector.load %arg2[%c0, %c0_1, %c0_2] : memref<1x128x3xi32, #tpu.memory_space<vmem>>, vector<1x128x3xi32>
    %4 = vector.shape_cast %3 : vector<1x128x3xi32> to vector<128x3xi32>
    %5 = vector.extract_strided_slice %4 {offsets = [0, 0], sizes = [128, 1], strides = [1, 1]} : vector<128x3xi32> to vector<128x1xi32>
    %6 = vector.extract_strided_slice %4 {offsets = [0, 1], sizes = [128, 1], strides = [1, 1]} : vector<128x3xi32> to vector<128x1xi32>
    %7 = vector.extract_strided_slice %4 {offsets = [0, 2], sizes = [128, 1], strides = [1, 1]} : vector<128x3xi32> to vector<128x1xi32>
    %c0_i32_3 = arith.constant 0 : i32
    %8 = vector.broadcast %c0_i32_3 : i32 to vector<128x1xi32>
    %9 = arith.cmpi ne, %7, %8 : vector<128x1xi32>
    %10 = tpu.iota {dimensions = array<i32: 1>} : vector<128x32xi32>
    %11 = vector.broadcast %5 : vector<128x1xi32> to vector<128x32xi32>
    %12 = arith.cmpi eq, %10, %11 : vector<128x32xi32>
    %c16_i32 = arith.constant 16 : i32
    %13 = vector.broadcast %c16_i32 : i32 to vector<128x1xi32>
    %14 = arith.addi %6, %13 : vector<128x1xi32>
    %15 = vector.broadcast %14 : vector<128x1xi32> to vector<128x32xi32>
    %16 = arith.cmpi eq, %10, %15 : vector<128x32xi32>
    %17 = arith.ori %12, %16 : vector<128x32xi1>
    %18 = vector.broadcast %9 : vector<128x1xi1> to vector<128x32xi1>
    %19 = arith.andi %17, %18 : vector<128x32xi1>
    %20 = arith.extui %19 : vector<128x32xi1> to vector<128x32xi32>
    %21 = arith.sitofp %20 : vector<128x32xi32> to vector<128x32xf32>
    %22 = arith.truncf %21 : vector<128x32xf32> to vector<128x32xbf16>
    %c0_4 = arith.constant 0 : index
    %c0_5 = arith.constant 0 : index
    %23 = vector.load %arg8[%c0_4, %c0_5] : memref<32x128xbf16, #tpu.memory_space<vmem>>, vector<32x128xbf16>
    %cst = arith.constant dense<0.000000e+00> : vector<128x128xf32>
    %24 = tpu.matmul %22, %23, %cst {dimension_numbers = #tpu.dot_dimension_numbers<[1], [0], [0], [1], [0, 0, 1, 1], [], []>} : vector<128x32xbf16>, vector<32x128xbf16>, vector<128x128xf32> -> vector<128x128xf32>
    %c0_6 = arith.constant 0 : index
    %c0_7 = arith.constant 0 : index
    %25 = vector.load %arg6[%c0_6, %c0_7] : memref<1x128xf32, #tpu.memory_space<vmem>>, vector<1x128xf32>
    %26 = vector.broadcast %25 : vector<1x128xf32> to vector<128x128xf32>
    %27 = arith.addf %24, %26 : vector<128x128xf32>
    %c0_8 = arith.constant 0 : index
    %c0_9 = arith.constant 0 : index
    %c0_10 = arith.constant 0 : index
    %28 = vector.load %arg7[%c0_8, %c0_9, %c0_10] : memref<1x128x128xf32, #tpu.memory_space<vmem>>, vector<1x128x128xf32>
    %29 = vector.shape_cast %28 : vector<1x128x128xf32> to vector<128x128xf32>
    %30 = vector.shape_cast %27 : vector<128x128xf32> to vector<1x128x128xf32>
    tpu.vector_store %arg7[%c0_8, %c0_9, %c0_10], %30 {strides = array<i32>} : memref<1x128x128xf32, #tpu.memory_space<vmem>>, vector<1x128x128xf32>,
    return
  }
  func.func @transform_0(%arg0: i32, %arg1: i32) -> (i32, i32, i32) {
    %c0_i32 = arith.constant 0 : i32
    %c0_i32_0 = arith.constant 0 : i32
    return %arg0, %arg1, %c0_i32 : i32, i32, i32
  }
  func.func @transform_1(%arg0: i32, %arg1: i32) -> (i32, i32, i32) {
    %c0_i32 = arith.constant 0 : i32
    %c0_i32_0 = arith.constant 0 : i32
    %c0_i32_1 = arith.constant 0 : i32
    return %arg0, %c0_i32, %c0_i32_0 : i32, i32, i32
  }
  func.func @transform_2(%arg0: i32, %arg1: i32) -> (i32, i32) {
    %c0_i32 = arith.constant 0 : i32
    %c0_i32_0 = arith.constant 0 : i32
    %c0_i32_1 = arith.constant 0 : i32
    return %c0_i32, %c0_i32_0 : i32, i32
  }
  func.func @transform_3(%arg0: i32, %arg1: i32) -> (i32, i32) {
    %c0_i32 = arith.constant 0 : i32
    %c0_i32_0 = arith.constant 0 : i32
    %c0_i32_1 = arith.constant 0 : i32
    return %c0_i32, %c0_i32_0 : i32, i32
  }
  func.func @transform_4(%arg0: i32, %arg1: i32) -> (i32, i32) {
    %c0_i32 = arith.constant 0 : i32
    %c0_i32_0 = arith.constant 0 : i32
    %c0_i32_1 = arith.constant 0 : i32
    return %c0_i32, %c0_i32_0 : i32, i32
  }
  func.func @transform_5(%arg0: i32, %arg1: i32) -> (i32, i32, i32) {
    %c0_i32 = arith.constant 0 : i32
    %c0_i32_0 = arith.constant 0 : i32
    return %arg0, %arg1, %c0_i32 : i32, i32, i32
  }
}

</mosaic_0001>

<llo_original>
// kernel: tpu_custom_call.1
$region0: #{tpu_custom_call.1}
  #allocation0 [shape = 'u32[]', space=smem, size = 0x4, offset = 0x4, fixed_abs, tag = 'smem constant byte address 0x4 - core index']
  #allocation1 [shape = 'u32[72,128]{1,0:T(1,128)}', space=vmem, size = 0x9000, scoped, tag = 'internal scratch']
  #allocation2 [shape = 'bf16[32,128]{1,0:T(8,128)(2,1)}', space=vmem, size = 0x2000, scoped, tag = 'scratch operand']
  %s0 = inlined_call_operand.vmem [shape: s32[2,128,3], index: 0, kind: input, shape index: {}]
  %s1 = inlined_call_operand.vmem [shape: bf16[2,16,128], index: 1, kind: input, shape index: {}]
  %s2 = inlined_call_operand.vmem [shape: bf16[128,128], index: 2, kind: input, shape index: {}]
  %s3 = inlined_call_operand.vmem [shape: bf16[128,128], index: 3, kind: input, shape index: {}]
  %s4 = inlined_call_operand.vmem [shape: f32[1,128], index: 4, kind: input, shape index: {}]
  %s5 = inlined_call_operand.hbm [shape: f32[2,128,128], index: 5, kind: output, shape index: {}]
  %s6 = sld [smem:[#allocation0]]
  $region57: #{tpu_custom_call.1} parent=0
    _
  %s8 = ssub.s32 1, %s6
  %s9 = scalar_select 0, %s8, %s6
  $region1: #{tpu_custom_call.1} parent=0
    #allocation3 [shape = 'u8[131072]{0}', space=vmem, size = 0x20000, scoped, tag = 'output window, operand 0']
    #allocation4 [shape = 's32[2]{0}', space=sflag, size = 0x8, scoped, tag = 'scoped memory for tpu_custom_call.1']
    %10 = vsyncpa [#allocation4], 0
    %s11 = scalar_lea.sflag [#allocation4], 1
    %12 = vsyncpa %s11, 0
    loop: start=0, step=1, limit=4
    $region2: #{tpu_custom_call.1} parent=1 // loop_pre_header
      _
    $region3: #{tpu_custom_call.1} parent=1 // loop_header
      %s14 = sphi 0, %s18
      %p15 = scmp.ge.s32.totalorder %s14, 4
      %s21 = sphi 0, %s33
      %s22 = sphi 0, %s29
      %s23 = sphi 0, %s21
      %s24 = sphi 0, %s22
      %s25 = sphi 0, %s23
      %s26 = sphi 0, %s24
      %s38 = sphi 0, %s40
      %s41 = sphi 0, %s38
      %s42 = sphi 0, %s41
      %s58 = sphi 0, %s42
      %s64 = sphi 0, %s66
      %s67 = sphi 0, %s64
      %s68 = sphi 0, %s67
      %s84 = sphi 0, %s68
      %s88 = sphi 0, %s88
      %s90 = sphi 0, %s88
      %s91 = sphi 0, %s90
      %s105 = sphi 0, %s91
      %s109 = sphi 0, %s109
      %s111 = sphi 0, %s109
      %s112 = sphi 0, %s111
      %s126 = sphi 0, %s112
      %s130 = sphi 0, %s130
      %s132 = sphi 0, %s130
      %s133 = sphi 0, %s132
      %s147 = sphi 0, %s133
      %s155 = sphi 0, %s157
      %s158 = sphi 0, %s155
      %s159 = sphi 0, %s158
      %s175 = sphi 0, %s159
    $region4: #{tpu_custom_call.1} parent=1 // loop_header_branch
      %17 = sbr.rel (%p15) target = $region8
    $region5: #{tpu_custom_call.1} parent=1 // loop_body
      %s19 = ssub.s32 %s14, 1
      %s20 = ssub.s32 %s14, 2
      %s27 = sadd.s32 1, %s22
      %p28 = scmp.ge.s32.totalorder %s27, 1
      %s29 = scalar_select %p28, 0, %s27
      %s30 = sadd.s32 1, %s21
      %s31 = scalar_select %p28, %s30, %s21
      %p32 = scmp.ge.s32.totalorder %s31, 2
      %s33 = scalar_select %p32, 0, %s31
      %s34 = ssub.s32 %s21, %s33
      %s35 = ssub.s32 %s22, %s29
      %s36 = sor.u32 %s34, %s35
      %p37 = scmp.eq.s32.totalorder %s36, 0
      %s39 = sadd.s32 %s38, 1
      %s40 = scalar_select %p37, %s38, %s39
      %p43 = pneg %p37
      %p44 = scmp.eq.s32.totalorder %s14, 1
      %p45 = por %p43, %p44
      %p46 = scmp.ne.s32.totalorder %s38, %s41
      %p47 = scmp.eq.s32.totalorder %s14, 0
      %p48 = por %p46, %p47
      %p49 = scmp.ne.s32.totalorder %s38, %s41
      %p50 = scmp.eq.s32.totalorder %s19, 1
      %p51 = por %p49, %p50
      %p52 = scmp.ne.s32.totalorder %s41, %s42
      %p53 = scmp.eq.s32.totalorder %s19, 0
      %p54 = por %p52, %p53
      %p55 = scmp.ne.s32.totalorder %s41, %s42
      %p56 = scmp.eq.s32.totalorder %s20, 1
      %p57 = por %p55, %p56
      %p59 = scmp.ne.s32.totalorder %s42, %s58
      %p60 = scmp.eq.s32.totalorder %s20, 0
      %p61 = por %p59, %p60
      %s62 = ssub.s32 %s21, %s33
      %p63 = scmp.eq.s32.totalorder %s62, 0
      %s65 = sadd.s32 %s64, 1
      %s66 = scalar_select %p63, %s64, %s65
      %p69 = pneg %p63
      %p70 = scmp.eq.s32.totalorder %s14, 1
      %p71 = por %p69, %p70
      %p72 = scmp.ne.s32.totalorder %s64, %s67
      %p73 = scmp.eq.s32.totalorder %s14, 0
      %p74 = por %p72, %p73
      %p75 = scmp.ne.s32.totalorder %s64, %s67
      %p76 = scmp.eq.s32.totalorder %s19, 1
      %p77 = por %p75, %p76
      %p78 = scmp.ne.s32.totalorder %s67, %s68
      %p79 = scmp.eq.s32.totalorder %s19, 0
      %p80 = por %p78, %p79
      %p81 = scmp.ne.s32.totalorder %s67, %s68
      %p82 = scmp.eq.s32.totalorder %s20, 1
      %p83 = por %p81, %p82
      %p85 = scmp.ne.s32.totalorder %s68, %s84
      %p86 = scmp.eq.s32.totalorder %s20, 0
      %p87 = por %p85, %p86
      %s89 = sadd.s32 %s88, 1
      %p92 = scmp.eq.s32.totalorder %s14, 1
      %p93 = scmp.ne.s32.totalorder %s88, %s90
      %p94 = scmp.eq.s32.totalorder %s14, 0
      %p95 = por %p93, %p94
      %p96 = scmp.ne.s32.totalorder %s88, %s90
      %p97 = scmp.eq.s32.totalorder %s19, 1
      %p98 = por %p96, %p97
      %p99 = scmp.ne.s32.totalorder %s90, %s91
      %p100 = scmp.eq.s32.totalorder %s19, 0
      %p101 = por %p99, %p100
      %p102 = scmp.ne.s32.totalorder %s90, %s91
      %p103 = scmp.eq.s32.totalorder %s20, 1
      %p104 = por %p102, %p103
      %p106 = scmp.ne.s32.totalorder %s91, %s105
      %p107 = scmp.eq.s32.totalorder %s20, 0
      %p108 = por %p106, %p107
      %s110 = sadd.s32 %s109, 1
      %p113 = scmp.eq.s32.totalorder %s14, 1
      %p114 = scmp.ne.s32.totalorder %s109, %s111
      %p115 = scmp.eq.s32.totalorder %s14, 0
      %p116 = por %p114, %p115
      %p117 = scmp.ne.s32.totalorder %s109, %s111
      %p118 = scmp.eq.s32.totalorder %s19, 1
      %p119 = por %p117, %p118
      %p120 = scmp.ne.s32.totalorder %s111, %s112
      %p121 = scmp.eq.s32.totalorder %s19, 0
      %p122 = por %p120, %p121
      %p123 = scmp.ne.s32.totalorder %s111, %s112
      %p124 = scmp.eq.s32.totalorder %s20, 1
      %p125 = por %p123, %p124
      %p127 = scmp.ne.s32.totalorder %s112, %s126
      %p128 = scmp.eq.s32.totalorder %s20, 0
      %p129 = por %p127, %p128
      %s131 = sadd.s32 %s130, 1
      %p134 = scmp.eq.s32.totalorder %s14, 1
      %p135 = scmp.ne.s32.totalorder %s130, %s132
      %p136 = scmp.eq.s32.totalorder %s14, 0
      %p137 = por %p135, %p136
      %p138 = scmp.ne.s32.totalorder %s130, %s132
      %p139 = scmp.eq.s32.totalorder %s19, 1
      %p140 = por %p138, %p139
      %p141 = scmp.ne.s32.totalorder %s132, %s133
      %p142 = scmp.eq.s32.totalorder %s19, 0
      %p143 = por %p141, %p142
      %p144 = scmp.ne.s32.totalorder %s132, %s133
      %p145 = scmp.eq.s32.totalorder %s20, 1
      %p146 = por %p144, %p145
      %p148 = scmp.ne.s32.totalorder %s133, %s147
      %p149 = scmp.eq.s32.totalorder %s20, 0
      %p150 = por %p148, %p149
      %s151 = ssub.s32 %s21, %s33
      %s152 = ssub.s32 %s22, %s29
      %s153 = sor.u32 %s151, %s152
      %p154 = scmp.eq.s32.totalorder %s153, 0
      %s156 = sadd.s32 %s155, 1
      %s157 = scalar_select %p154, %s155, %s156
      %p160 = pneg %p154
      %p161 = scmp.eq.s32.totalorder %s14, 1
      %p162 = por %p160, %p161
      %p163 = scmp.ne.s32.totalorder %s155, %s158
      %p164 = scmp.eq.s32.totalorder %s14, 0
      %p165 = por %p163, %p164
      %p166 = scmp.ne.s32.totalorder %s155, %s158
      %p167 = scmp.eq.s32.totalorder %s19, 1
      %p168 = por %p166, %p167
      %p169 = scmp.ne.s32.totalorder %s158, %s159
      %p170 = scmp.eq.s32.totalorder %s19, 0
      %p171 = por %p169, %p170
      %p172 = scmp.ne.s32.totalorder %s158, %s159
      %p173 = scmp.eq.s32.totalorder %s20, 1
      %p174 = por %p172, %p173
      %p176 = scmp.ne.s32.totalorder %s159, %s175
      %p177 = scmp.eq.s32.totalorder %s20, 0
      %p178 = por %p176, %p177
      %p179 = scmp.le.s32.totalorder 1, %s14
      %p180 = scmp.lt.s32.totalorder %s14, 3
      %p181 = pnand %p179, %p180
      %p182 = pneg %p181
      // Predicated region
      $region9: #{tpu_custom_call.1} parent=5 // pred_check
        _
      $region10: #{tpu_custom_call.1} parent=5 // pred_check_branch
        %184 = sbr.rel (%p181) target = $region12
      $region11: #{tpu_custom_call.1} parent=5 // pred_region
        %s185 = ssub.s32 %s14, 1
        // Predicated region
        $region13: #{tpu_custom_call.1} parent=11 // pred_check
          %p186 = pneg %p101
        $region14: #{tpu_custom_call.1} parent=11 // pred_check_branch
          %188 = sbr.rel (%p186) target = $region16
        $region15: #{tpu_custom_call.1} parent=11 // pred_region
          _
        $region16: #{tpu_custom_call.1} parent=11 // pred_fallthru
          _
        // Predicated region
        $region17: #{tpu_custom_call.1} parent=11 // pred_check
          %p189 = pneg %p122
        $region18: #{tpu_custom_call.1} parent=11 // pred_check_branch
          %191 = sbr.rel (%p189) target = $region20
        $region19: #{tpu_custom_call.1} parent=11 // pred_region
          _
        $region20: #{tpu_custom_call.1} parent=11 // pred_fallthru
          _
        // Predicated region
        $region21: #{tpu_custom_call.1} parent=11 // pred_check
          %p192 = pneg %p143
        $region22: #{tpu_custom_call.1} parent=11 // pred_check_branch
          %194 = sbr.rel (%p192) target = $region24
        $region23: #{tpu_custom_call.1} parent=11 // pred_region
          _
        $region24: #{tpu_custom_call.1} parent=11 // pred_fallthru
          _
      $region12: #{tpu_custom_call.1} parent=5 // pred_fallthru
        _
      %p195 = scmp.lt.s32.totalorder %s14, 2
      // Predicated region
      $region25: #{tpu_custom_call.1} parent=5 // pred_check
        %p196 = pneg %p195
      $region26: #{tpu_custom_call.1} parent=5 // pred_check_branch
        %198 = sbr.rel (%p196) target = $region28
      $region27: #{tpu_custom_call.1} parent=5 // pred_region
        // Predicated region
        $region29: #{tpu_custom_call.1} parent=27 // pred_check
          %p199 = pneg %p48
        $region30: #{tpu_custom_call.1} parent=27 // pred_check_branch
          %201 = sbr.rel (%p199) target = $region32
        $region31: #{tpu_custom_call.1} parent=27 // pred_region
          %s202 = smul.u32 16, %s22
          %p203 = scmp.lt.s32.totalorder %s21, 1
          %s204 = scalar_select %p203, %s21, 1
          %p205 = scmp.lt.s32.totalorder %s202, 15
          %s206 = scalar_select %p205, %s202, 15
          %s207 = smul.addr %s204, 16
          %s208 = sadd.s32 %s206, %s207
          %s209 = smul.addr %s208, 8
          %s210 = scalar_lea.vmem %s0, %s209
          %s211 = smul.u32 16, %s22
        $region32: #{tpu_custom_call.1} parent=27 // pred_fallthru
          _
        // Predicated region
        $region33: #{tpu_custom_call.1} parent=27 // pred_check
          %p212 = pneg %p74
        $region34: #{tpu_custom_call.1} parent=27 // pred_check_branch
          %214 = sbr.rel (%p212) target = $region36
        $region35: #{tpu_custom_call.1} parent=27 // pred_region
          %p215 = scmp.lt.s32.totalorder %s21, 1
          %s216 = scalar_select %p215, %s21, 1
          %s217 = smul.addr %s216, 2
          %s218 = smul.addr %s217, 4
          %s219 = scalar_lea.vmem %s1, %s218
        $region36: #{tpu_custom_call.1} parent=27 // pred_fallthru
          _
      $region28: #{tpu_custom_call.1} parent=5 // pred_fallthru
        _
      %p220 = scmp.le.s32.totalorder 1, %s14
      %p221 = scmp.lt.s32.totalorder %s14, 3
      %p222 = pnand %p220, %p221
      %p223 = pneg %p222
      // Predicated region
      $region37: #{tpu_custom_call.1} parent=5 // pred_check
        _
      $region38: #{tpu_custom_call.1} parent=5 // pred_check_branch
        %225 = sbr.rel (%p222) target = $region40
      $region39: #{tpu_custom_call.1} parent=5 // pred_region
        %s226 = ssub.s32 %s14, 1
        %s227 = smul.u32 16, %s24
        %p228 = scmp.lt.s32.totalorder %s23, 1
        %s229 = scalar_select %p228, %s23, 1
        %p230 = scmp.lt.s32.totalorder %s227, 15
        %s231 = scalar_select %p230, %s227, 15
        %s232 = smul.addr %s229, 16
        %s233 = sadd.s32 %s231, %s232
        %s234 = smul.addr %s233, 8
        %s235 = scalar_lea.vmem %s0, %s234
        %p236 = pneg %p54
        %p237 = pneg %p51
        %p238 = scmp.lt.s32.totalorder %s23, 1
        %s239 = scalar_select %p238, %s23, 1
        %s240 = smul.addr %s239, 2
        %s241 = smul.addr %s240, 4
        %s242 = scalar_lea.vmem %s1, %s241
        %p243 = pneg %p80
        %p244 = pneg %p77
        %p245 = pneg %p101
        %p246 = pneg %p98
        %p247 = pneg %p122
        %p248 = pneg %p119
        %p249 = pneg %p143
        %p250 = pneg %p140
        %p251 = pneg %p171
        %p252 = pneg %p168
        %s253 = sand.u32 %s158, 1
        %s254 = scalar_lea.sflag [#allocation4], %s253
        %s255 = sand.u32 %s158, 1
        %s256 = smul.addr %s255, 128
        %s257 = scalar_lea.vmem [#allocation3], %s256
        %s258 = smul.u32 16, %s24
        %p259 = scmp.lt.s32.totalorder %s23, 1
        %s260 = scalar_select %p259, %s23, 1
        %p261 = scmp.lt.s32.totalorder %s258, 15
        %s262 = scalar_select %p261, %s258, 15
        %s263 = smul.addr %s260, 16
        %s264 = sadd.s32 %s262, %s263
        %s265 = smul.addr %s264, 8
        %s266 = scalar_lea.vmem %s0, %s265
        %s267 = smul.u32 16, %s24
        %p268 = scmp.lt.s32.totalorder %s23, 1
        %s269 = scalar_select %p268, %s23, 1
        %s270 = smul.addr %s269, 2
        %s271 = smul.addr %s270, 4
        %s272 = scalar_lea.vmem %s1, %s271
        %s273 = smul.u32 16, %s24
        %p275 = scmp.eq.s32.totalorder %s24, 0
        // Predicated region
        $region41: #{tpu_custom_call.1} parent=39 // pred_check
          %p276 = pneg %p275
        $region42: #{tpu_custom_call.1} parent=39 // pred_check_branch
          %278 = sbr.rel (%p276) target = $region44
        $region43: #{tpu_custom_call.1} parent=39 // pred_region
          %v279 = vld [vmem:[%s272] sm:$0xf]
          %v280 = vld [vmem:[%s272 + $0x4] sm:$0xf]
          %v281 = vld [vmem:[%s2] sm:$0xf]
          %v282 = vld [vmem:[%s2 + $0x4] sm:$0xf]
          %v283 = vld [vmem:[%s2 + $0x8] sm:$0xf]
          %v284 = vld [vmem:[%s2 + $0xc] sm:$0xf]
          %v285 = vld [vmem:[%s2 + $0x10] sm:$0xf]
          %v286 = vld [vmem:[%s2 + $0x14] sm:$0xf]
          %v287 = vld [vmem:[%s2 + $0x18] sm:$0xf]
          %v288 = vld [vmem:[%s2 + $0x1c] sm:$0xf]
          %v289 = vld [vmem:[%s2 + $0x20] sm:$0xf]
          %v290 = vld [vmem:[%s2 + $0x24] sm:$0xf]
          %v291 = vld [vmem:[%s2 + $0x28] sm:$0xf]
          %v292 = vld [vmem:[%s2 + $0x2c] sm:$0xf]
          %v293 = vld [vmem:[%s2 + $0x30] sm:$0xf]
          %v294 = vld [vmem:[%s2 + $0x34] sm:$0xf]
          %v295 = vld [vmem:[%s2 + $0x38] sm:$0xf]
          %v296 = vld [vmem:[%s2 + $0x3c] sm:$0xf]
          %v299 = vunpack.c.l.b16 %v279
          %v300 = vunpack.c.l.b16 %v280
          %v301 = vpack.c.b16 %v300, %v299
          %v319 = vunpack.c.l.b16 %v281
          %v320 = vunpack.c.l.b16 %v282
          %v321 = vunpack.c.l.b16 %v283
          %v322 = vunpack.c.l.b16 %v284
          %v323 = vunpack.c.l.b16 %v285
          %v324 = vunpack.c.l.b16 %v286
          %v325 = vunpack.c.l.b16 %v287
          %v326 = vunpack.c.l.b16 %v288
          %v327 = vunpack.c.l.b16 %v289
          %v328 = vunpack.c.l.b16 %v290
          %v329 = vunpack.c.l.b16 %v291
          %v330 = vunpack.c.l.b16 %v292
          %v331 = vunpack.c.l.b16 %v293
          %v332 = vunpack.c.l.b16 %v294
          %v333 = vunpack.c.l.b16 %v295
          %v334 = vunpack.c.l.b16 %v296
          %v335 = vpack.c.b16 %v320, %v319
          %v336 = vpack.c.b16 %v322, %v321
          %v337 = vpack.c.b16 %v324, %v323
          %v338 = vpack.c.b16 %v326, %v325
          %v339 = vpack.c.b16 %v328, %v327
          %v340 = vpack.c.b16 %v330, %v329
          %v341 = vpack.c.b16 %v332, %v331
          %v342 = vpack.c.b16 %v334, %v333
          %351 = vmatpush.bf16.msra.mxu0 %v342
          %352 = vmatpush.bf16.msra.mxu0 %v341
          %353 = vmatpush.bf16.msra.mxu0 %v340
          %354 = vmatpush.bf16.msra.mxu0 %v339
          %355 = vmatpush.bf16.msra.mxu0 %v338
          %356 = vmatpush.bf16.msra.mxu0 %v337
          %357 = vmatpush.bf16.msra.mxu0 %v336
          %358 = vmatpush.bf16.msra.mxu0 %v335
          %359 = vmatmul.bf16.gmra.mxu0 %v301
          %v360 = vpop.f32.mrf.mxu0
          %v361 = vadd.f32 0.0, %v360
          %v362 = vpop.f32.mrf.mxu0
          %v363 = vadd.f32 0.0, %v362
          %364 = vdwg.mxu0
          %v365 = vpack.c.bf16 %v361, %v361
          %v366 = vpack.c.bf16 %v363, %v363
          %367 = vst [vmem:[#allocation2] sm:$0xf] %v365
          %368 = vst [vmem:[#allocation2 + $0x4] sm:$0xf] %v366
          %v369 = vld [vmem:[%s3] sm:$0xf]
          %v370 = vld [vmem:[%s3 + $0x4] sm:$0xf]
          %v371 = vld [vmem:[%s3 + $0x8] sm:$0xf]
          %v372 = vld [vmem:[%s3 + $0xc] sm:$0xf]
          %v373 = vld [vmem:[%s3 + $0x10] sm:$0xf]
          %v374 = vld [vmem:[%s3 + $0x14] sm:$0xf]
          %v375 = vld [vmem:[%s3 + $0x18] sm:$0xf]
          %v376 = vld [vmem:[%s3 + $0x1c] sm:$0xf]
          %v377 = vld [vmem:[%s3 + $0x20] sm:$0xf]
          %v378 = vld [vmem:[%s3 + $0x24] sm:$0xf]
          %v379 = vld [vmem:[%s3 + $0x28] sm:$0xf]
          %v380 = vld [vmem:[%s3 + $0x2c] sm:$0xf]
          %v381 = vld [vmem:[%s3 + $0x30] sm:$0xf]
          %v382 = vld [vmem:[%s3 + $0x34] sm:$0xf]
          %v383 = vld [vmem:[%s3 + $0x38] sm:$0xf]
          %v384 = vld [vmem:[%s3 + $0x3c] sm:$0xf]
          %v401 = vunpack.c.l.b16 %v369
          %v402 = vunpack.c.l.b16 %v370
          %v403 = vunpack.c.l.b16 %v371
          %v404 = vunpack.c.l.b16 %v372
          %v405 = vunpack.c.l.b16 %v373
          %v406 = vunpack.c.l.b16 %v374
          %v407 = vunpack.c.l.b16 %v375
          %v408 = vunpack.c.l.b16 %v376
          %v409 = vunpack.c.l.b16 %v377
          %v410 = vunpack.c.l.b16 %v378
          %v411 = vunpack.c.l.b16 %v379
          %v412 = vunpack.c.l.b16 %v380
          %v413 = vunpack.c.l.b16 %v381
          %v414 = vunpack.c.l.b16 %v382
          %v415 = vunpack.c.l.b16 %v383
          %v416 = vunpack.c.l.b16 %v384
          %v417 = vpack.c.b16 %v402, %v401
          %v418 = vpack.c.b16 %v404, %v403
          %v419 = vpack.c.b16 %v406, %v405
          %v420 = vpack.c.b16 %v408, %v407
          %v421 = vpack.c.b16 %v410, %v409
          %v422 = vpack.c.b16 %v412, %v411
          %v423 = vpack.c.b16 %v414, %v413
          %v424 = vpack.c.b16 %v416, %v415
          %433 = vmatpush.bf16.msra.mxu0 %v424
          %434 = vmatpush.bf16.msra.mxu0 %v423
          %435 = vmatpush.bf16.msra.mxu0 %v422
          %436 = vmatpush.bf16.msra.mxu0 %v421
          %437 = vmatpush.bf16.msra.mxu0 %v420
          %438 = vmatpush.bf16.msra.mxu0 %v419
          %439 = vmatpush.bf16.msra.mxu0 %v418
          %440 = vmatpush.bf16.msra.mxu0 %v417
          %441 = vmatmul.bf16.gmra.mxu0 %v301
          %v442 = vpop.f32.mrf.mxu0
          %v443 = vadd.f32 0.0, %v442
          %v444 = vpop.f32.mrf.mxu0
          %v445 = vadd.f32 0.0, %v444
          %446 = vdwg.mxu0
          %v447 = vpack.c.bf16 %v443, %v443
          %v448 = vpack.c.bf16 %v445, %v445
          %449 = vst [vmem:[#allocation2 + $0x8] sm:$0xf] %v447
          %450 = vst [vmem:[#allocation2 + $0xc] sm:$0xf] %v448
        $region44: #{tpu_custom_call.1} parent=39 // pred_fallthru
          _
        %v451 = vld [vmem:[%s266] sm:$0xff]
        %v452 = vld [vmem:[%s266 + $0x8] sm:$0xff]
        %v453 = vld [vmem:[%s266 + $0x10] sm:$0xff]
        %v454 = vld [vmem:[%s266 + $0x18] sm:$0xff]
        %v455 = vld [vmem:[%s266 + $0x20] sm:$0xff]
        %v456 = vld [vmem:[%s266 + $0x28] sm:$0xff]
        %v457 = vld [vmem:[%s266 + $0x30] sm:$0xff]
        %v458 = vld [vmem:[%s266 + $0x38] sm:$0xff]
        %v459 = vld [vmem:[%s266 + $0x40] sm:$0xff]
        %v460 = vld [vmem:[%s266 + $0x48] sm:$0xff]
        %v461 = vld [vmem:[%s266 + $0x50] sm:$0xff]
        %v462 = vld [vmem:[%s266 + $0x58] sm:$0xff]
        %v463 = vld [vmem:[%s266 + $0x60] sm:$0xff]
        %v464 = vld [vmem:[%s266 + $0x68] sm:$0xff]
        %v465 = vld [vmem:[%s266 + $0x70] sm:$0xff]
        %v466 = vld [vmem:[%s266 + $0x78] sm:$0xff]
        %vm467 = vcmp.ne.s32.totalorder %v451, 0
        %vm468 = vcmp.ne.s32.totalorder %v452, 0
        %vm469 = vcmp.ne.s32.totalorder %v453, 0
        %vm470 = vcmp.ne.s32.totalorder %v454, 0
        %vm471 = vcmp.ne.s32.totalorder %v455, 0
        %vm472 = vcmp.ne.s32.totalorder %v456, 0
        %vm473 = vcmp.ne.s32.totalorder %v457, 0
        %vm474 = vcmp.ne.s32.totalorder %v458, 0
        %vm475 = vcmp.ne.s32.totalorder %v459, 0
        %vm476 = vcmp.ne.s32.totalorder %v460, 0
        %vm477 = vcmp.ne.s32.totalorder %v461, 0
        %vm478 = vcmp.ne.s32.totalorder %v462, 0
        %vm479 = vcmp.ne.s32.totalorder %v463, 0
        %vm480 = vcmp.ne.s32.totalorder %v464, 0
        %vm481 = vcmp.ne.s32.totalorder %v465, 0
        %vm482 = vcmp.ne.s32.totalorder %v466, 0
        %v483 = vlaneseq
        %v484 = vand.u32 %v483, 127
        %485 = vset.pattern.permute.xlu0 0
        %486 = vperm.xlu0 %485, %v451
        %v487 = vpop.permute.xlu0 %486
        %488 = vset.pattern.permute.xlu0 0
        %489 = vperm.xlu0 %488, %v452
        %v490 = vpop.permute.xlu0 %489
        %491 = vset.pattern.permute.xlu0 0
        %492 = vperm.xlu0 %491, %v453
        %v493 = vpop.permute.xlu0 %492
        %494 = vset.pattern.permute.xlu0 0
        %495 = vperm.xlu0 %494, %v454
        %v496 = vpop.permute.xlu0 %495
        %497 = vset.pattern.permute.xlu0 0
        %498 = vperm.xlu0 %497, %v455
        %v499 = vpop.permute.xlu0 %498
        %500 = vset.pattern.permute.xlu0 0
        %501 = vperm.xlu0 %500, %v456
        %v502 = vpop.permute.xlu0 %501
        %503 = vset.pattern.permute.xlu0 0
        %504 = vperm.xlu0 %503, %v457
        %v505 = vpop.permute.xlu0 %504
        %506 = vset.pattern.permute.xlu0 0
        %507 = vperm.xlu0 %506, %v458
        %v508 = vpop.permute.xlu0 %507
        %509 = vset.pattern.permute.xlu0 0
        %510 = vperm.xlu0 %509, %v459
        %v511 = vpop.permute.xlu0 %510
        %512 = vset.pattern.permute.xlu0 0
        %513 = vperm.xlu0 %512, %v460
        %v514 = vpop.permute.xlu0 %513
        %515 = vset.pattern.permute.xlu0 0
        %516 = vperm.xlu0 %515, %v461
        %v517 = vpop.permute.xlu0 %516
        %518 = vset.pattern.permute.xlu0 0
        %519 = vperm.xlu0 %518, %v462
        %v520 = vpop.permute.xlu0 %519
        %521 = vset.pattern.permute.xlu0 0
        %522 = vperm.xlu0 %521, %v463
        %v523 = vpop.permute.xlu0 %522
        %524 = vset.pattern.permute.xlu0 0
        %525 = vperm.xlu0 %524, %v464
        %v526 = vpop.permute.xlu0 %525
        %527 = vset.pattern.permute.xlu0 0
        %528 = vperm.xlu0 %527, %v465
        %v529 = vpop.permute.xlu0 %528
        %530 = vset.pattern.permute.xlu0 0
        %531 = vperm.xlu0 %530, %v466
        %v532 = vpop.permute.xlu0 %531
        %vm533 = vcmp.eq.s32.totalorder %v484, %v487
        %vm534 = vcmp.eq.s32.totalorder %v484, %v490
        %vm535 = vcmp.eq.s32.totalorder %v484, %v493
        %vm536 = vcmp.eq.s32.totalorder %v484, %v496
        %vm537 = vcmp.eq.s32.totalorder %v484, %v499
        %vm538 = vcmp.eq.s32.totalorder %v484, %v502
        %vm539 = vcmp.eq.s32.totalorder %v484, %v505
        %vm540 = vcmp.eq.s32.totalorder %v484, %v508
        %vm541 = vcmp.eq.s32.totalorder %v484, %v511
        %vm542 = vcmp.eq.s32.totalorder %v484, %v514
        %vm543 = vcmp.eq.s32.totalorder %v484, %v517
        %vm544 = vcmp.eq.s32.totalorder %v484, %v520
        %vm545 = vcmp.eq.s32.totalorder %v484, %v523
        %vm546 = vcmp.eq.s32.totalorder %v484, %v526
        %vm547 = vcmp.eq.s32.totalorder %v484, %v529
        %vm548 = vcmp.eq.s32.totalorder %v484, %v532
        %v549 = vadd.s32 %v451, 16
        %v550 = vadd.s32 %v452, 16
        %v551 = vadd.s32 %v453, 16
        %v552 = vadd.s32 %v454, 16
        %v553 = vadd.s32 %v455, 16
        %v554 = vadd.s32 %v456, 16
        %v555 = vadd.s32 %v457, 16
        %v556 = vadd.s32 %v458, 16
        %v557 = vadd.s32 %v459, 16
        %v558 = vadd.s32 %v460, 16
        %v559 = vadd.s32 %v461, 16
        %v560 = vadd.s32 %v462, 16
        %v561 = vadd.s32 %v463, 16
        %v562 = vadd.s32 %v464, 16
        %v563 = vadd.s32 %v465, 16
        %v564 = vadd.s32 %v466, 16
        %565 = vset.pattern.permute.xlu0 1
        %566 = vperm.xlu0 %565, %v549
        %v567 = vpop.permute.xlu0 %566
        %568 = vset.pattern.permute.xlu0 1
        %569 = vperm.xlu0 %568, %v550
        %v570 = vpop.permute.xlu0 %569
        %571 = vset.pattern.permute.xlu0 1
        %572 = vperm.xlu0 %571, %v551
        %v573 = vpop.permute.xlu0 %572
        %574 = vset.pattern.permute.xlu0 1
        %575 = vperm.xlu0 %574, %v552
        %v576 = vpop.permute.xlu0 %575
        %577 = vset.pattern.permute.xlu0 1
        %578 = vperm.xlu0 %577, %v553
        %v579 = vpop.permute.xlu0 %578
        %580 = vset.pattern.permute.xlu0 1
        %581 = vperm.xlu0 %580, %v554
        %v582 = vpop.permute.xlu0 %581
        %583 = vset.pattern.permute.xlu0 1
        %584 = vperm.xlu0 %583, %v555
        %v585 = vpop.permute.xlu0 %584
        %586 = vset.pattern.permute.xlu0 1
        %587 = vperm.xlu0 %586, %v556
        %v588 = vpop.permute.xlu0 %587
        %589 = vset.pattern.permute.xlu0 1
        %590 = vperm.xlu0 %589, %v557
        %v591 = vpop.permute.xlu0 %590
        %592 = vset.pattern.permute.xlu0 1
        %593 = vperm.xlu0 %592, %v558
        %v594 = vpop.permute.xlu0 %593
        %595 = vset.pattern.permute.xlu0 1
        %596 = vperm.xlu0 %595, %v559
        %v597 = vpop.permute.xlu0 %596
        %598 = vset.pattern.permute.xlu0 1
        %599 = vperm.xlu0 %598, %v560
        %v600 = vpop.permute.xlu0 %599
        %601 = vset.pattern.permute.xlu0 1
        %602 = vperm.xlu0 %601, %v561
        %v603 = vpop.permute.xlu0 %602
        %604 = vset.pattern.permute.xlu0 1
        %605 = vperm.xlu0 %604, %v562
        %v606 = vpop.permute.xlu0 %605
        %607 = vset.pattern.permute.xlu0 1
        %608 = vperm.xlu0 %607, %v563
        %v609 = vpop.permute.xlu0 %608
        %610 = vset.pattern.permute.xlu0 1
        %611 = vperm.xlu0 %610, %v564
        %v612 = vpop.permute.xlu0 %611
        %vm613 = vcmp.eq.s32.totalorder %v484, %v567
        %vm614 = vcmp.eq.s32.totalorder %v484, %v570
        %vm615 = vcmp.eq.s32.totalorder %v484, %v573
        %vm616 = vcmp.eq.s32.totalorder %v484, %v576
        %vm617 = vcmp.eq.s32.totalorder %v484, %v579
        %vm618 = vcmp.eq.s32.totalorder %v484, %v582
        %vm619 = vcmp.eq.s32.totalorder %v484, %v585
        %vm620 = vcmp.eq.s32.totalorder %v484, %v588
        %vm621 = vcmp.eq.s32.totalorder %v484, %v591
        %vm622 = vcmp.eq.s32.totalorder %v484, %v594
        %vm623 = vcmp.eq.s32.totalorder %v484, %v597
        %vm624 = vcmp.eq.s32.totalorder %v484, %v600
        %vm625 = vcmp.eq.s32.totalorder %v484, %v603
        %vm626 = vcmp.eq.s32.totalorder %v484, %v606
        %vm627 = vcmp.eq.s32.totalorder %v484, %v609
        %vm628 = vcmp.eq.s32.totalorder %v484, %v612
        %vm629 = vmor %vm533, %vm613
        %vm630 = vmor %vm534, %vm614
        %vm631 = vmor %vm535, %vm615
        %vm632 = vmor %vm536, %vm616
        %vm633 = vmor %vm537, %vm617
        %vm634 = vmor %vm538, %vm618
        %vm635 = vmor %vm539, %vm619
        %vm636 = vmor %vm540, %vm620
        %vm637 = vmor %vm541, %vm621
        %vm638 = vmor %vm542, %vm622
        %vm639 = vmor %vm543, %vm623
        %vm640 = vmor %vm544, %vm624
        %vm641 = vmor %vm545, %vm625
        %vm642 = vmor %vm546, %vm626
        %vm643 = vmor %vm547, %vm627
        %vm644 = vmor %vm548, %vm628
        %v645 = vsel %vm467, 1, 0
        %v646 = vsel %vm468, 1, 0
        %v647 = vsel %vm469, 1, 0
        %v648 = vsel %vm470, 1, 0
        %v649 = vsel %vm471, 1, 0
        %v650 = vsel %vm472, 1, 0
        %v651 = vsel %vm473, 1, 0
        %v652 = vsel %vm474, 1, 0
        %v653 = vsel %vm475, 1, 0
        %v654 = vsel %vm476, 1, 0
        %v655 = vsel %vm477, 1, 0
        %v656 = vsel %vm478, 1, 0
        %v657 = vsel %vm479, 1, 0
        %v658 = vsel %vm480, 1, 0
        %v659 = vsel %vm481, 1, 0
        %v660 = vsel %vm482, 1, 0
        %661 = vset.pattern.permute.xlu0 2
        %662 = vperm.xlu0 %661, %v645
        %v663 = vpop.permute.xlu0 %662
        %664 = vset.pattern.permute.xlu0 2
        %665 = vperm.xlu0 %664, %v646
        %v666 = vpop.permute.xlu0 %665
        %667 = vset.pattern.permute.xlu0 2
        %668 = vperm.xlu0 %667, %v647
        %v669 = vpop.permute.xlu0 %668
        %670 = vset.pattern.permute.xlu0 2
        %671 = vperm.xlu0 %670, %v648
        %v672 = vpop.permute.xlu0 %671
        %673 = vset.pattern.permute.xlu0 2
        %674 = vperm.xlu0 %673, %v649
        %v675 = vpop.permute.xlu0 %674
        %676 = vset.pattern.permute.xlu0 2
        %677 = vperm.xlu0 %676, %v650
        %v678 = vpop.permute.xlu0 %677
        %679 = vset.pattern.permute.xlu0 2
        %680 = vperm.xlu0 %679, %v651
        %v681 = vpop.permute.xlu0 %680
        %682 = vset.pattern.permute.xlu0 2
        %683 = vperm.xlu0 %682, %v652
        %v684 = vpop.permute.xlu0 %683
        %685 = vset.pattern.permute.xlu0 2
        %686 = vperm.xlu0 %685, %v653
        %v687 = vpop.permute.xlu0 %686
        %688 = vset.pattern.permute.xlu0 2
        %689 = vperm.xlu0 %688, %v654
        %v690 = vpop.permute.xlu0 %689
        %691 = vset.pattern.permute.xlu0 2
        %692 = vperm.xlu0 %691, %v655
        %v693 = vpop.permute.xlu0 %692
        %694 = vset.pattern.permute.xlu0 2
        %695 = vperm.xlu0 %694, %v656
        %v696 = vpop.permute.xlu0 %695
        %697 = vset.pattern.permute.xlu0 2
        %698 = vperm.xlu0 %697, %v657
        %v699 = vpop.permute.xlu0 %698
        %700 = vset.pattern.permute.xlu0 2
        %701 = vperm.xlu0 %700, %v658
        %v702 = vpop.permute.xlu0 %701
        %703 = vset.pattern.permute.xlu0 2
        %704 = vperm.xlu0 %703, %v659
        %v705 = vpop.permute.xlu0 %704
        %706 = vset.pattern.permute.xlu0 2
        %707 = vperm.xlu0 %706, %v660
        %v708 = vpop.permute.xlu0 %707
        %vm709 = vcmp.eq.s32.totalorder %v663, 1
        %vm710 = vcmp.eq.s32.totalorder %v666, 1
        %vm711 = vcmp.eq.s32.totalorder %v669, 1
        %vm712 = vcmp.eq.s32.totalorder %v672, 1
        %vm713 = vcmp.eq.s32.totalorder %v675, 1
        %vm714 = vcmp.eq.s32.totalorder %v678, 1
        %vm715 = vcmp.eq.s32.totalorder %v681, 1
        %vm716 = vcmp.eq.s32.totalorder %v684, 1
        %vm717 = vcmp.eq.s32.totalorder %v687, 1
        %vm718 = vcmp.eq.s32.totalorder %v690, 1
        %vm719 = vcmp.eq.s32.totalorder %v693, 1
        %vm720 = vcmp.eq.s32.totalorder %v696, 1
        %vm721 = vcmp.eq.s32.totalorder %v699, 1
        %vm722 = vcmp.eq.s32.totalorder %v702, 1
        %vm723 = vcmp.eq.s32.totalorder %v705, 1
        %vm724 = vcmp.eq.s32.totalorder %v708, 1
        %vm725 = vmand %vm629, %vm709
        %vm726 = vmand %vm630, %vm710
        %vm727 = vmand %vm631, %vm711
        %vm728 = vmand %vm632, %vm712
        %vm729 = vmand %vm633, %vm713
        %vm730 = vmand %vm634, %vm714
        %vm731 = vmand %vm635, %vm715
        %vm732 = vmand %vm636, %vm716
        %vm733 = vmand %vm637, %vm717
        %vm734 = vmand %vm638, %vm718
        %vm735 = vmand %vm639, %vm719
        %vm736 = vmand %vm640, %vm720
        %vm737 = vmand %vm641, %vm721
        %vm738 = vmand %vm642, %vm722
        %vm739 = vmand %vm643, %vm723
        %vm740 = vmand %vm644, %vm724
        %v741 = vsel %vm725, 1, 0
        %v742 = vsel %vm726, 1, 0
        %v743 = vsel %vm727, 1, 0
        %v744 = vsel %vm728, 1, 0
        %v745 = vsel %vm729, 1, 0
        %v746 = vsel %vm730, 1, 0
        %v747 = vsel %vm731, 1, 0
        %v748 = vsel %vm732, 1, 0
        %v749 = vsel %vm733, 1, 0
        %v750 = vsel %vm734, 1, 0
        %v751 = vsel %vm735, 1, 0
        %v752 = vsel %vm736, 1, 0
        %v753 = vsel %vm737, 1, 0
        %v754 = vsel %vm738, 1, 0
        %v755 = vsel %vm739, 1, 0
        %v756 = vsel %vm740, 1, 0
        %v757 = vcvt.s32.f32 %v741
        %v758 = vcvt.s32.f32 %v742
        %v759 = vcvt.s32.f32 %v743
        %v760 = vcvt.s32.f32 %v744
        %v761 = vcvt.s32.f32 %v745
        %v762 = vcvt.s32.f32 %v746
        %v763 = vcvt.s32.f32 %v747
        %v764 = vcvt.s32.f32 %v748
        %v765 = vcvt.s32.f32 %v749
        %v766 = vcvt.s32.f32 %v750
        %v767 = vcvt.s32.f32 %v751
        %v768 = vcvt.s32.f32 %v752
        %v769 = vcvt.s32.f32 %v753
        %v770 = vcvt.s32.f32 %v754
        %v771 = vcvt.s32.f32 %v755
        %v772 = vcvt.s32.f32 %v756
        %v773 = vpack.c.bf16 %v758, %v757
        %v774 = vpack.c.bf16 %v760, %v759
        %v775 = vpack.c.bf16 %v762, %v761
        %v776 = vpack.c.bf16 %v764, %v763
        %v777 = vpack.c.bf16 %v766, %v765
        %v778 = vpack.c.bf16 %v768, %v767
        %v779 = vpack.c.bf16 %v770, %v769
        %v780 = vpack.c.bf16 %v772, %v771
        %v781 = vld [vmem:[#allocation2] sm:$0xf]
        %v782 = vld [vmem:[#allocation2 + $0x4] sm:$0xf]
        %v783 = vld [vmem:[#allocation2 + $0x8] sm:$0xf]
        %v784 = vld [vmem:[#allocation2 + $0xc] sm:$0xf]
        %v785 = vld [vmem:[%s4] sm:$0x1]
        %v787 = vperm.slane %v785, 0
        %v793 = vunpack.c.l.b16 %v781
        %v794 = vunpack.c.l.b16 %v782
        %v795 = vunpack.c.l.b16 %v783
        %v796 = vunpack.c.l.b16 %v784
        %v797 = vpack.c.b16 %v794, %v793
        %v798 = vpack.c.b16 %v796, %v795
        %vm801 = vcmask 261120
        %v803 = vsel %vm801, %v773, 0
        %v806 = vsel %vm801, %v774, 0
        %v809 = vsel %vm801, %v775, 0
        %v812 = vsel %vm801, %v776, 0
        %v815 = vsel %vm801, %v777, 0
        %v818 = vsel %vm801, %v778, 0
        %v821 = vsel %vm801, %v779, 0
        %v824 = vsel %vm801, %v780, 0
        %826 = vmatpush.bf16.msra.mxu0 0
        %827 = vmatpush.bf16.msra.mxu0 0
        %828 = vmatpush.bf16.msra.mxu0 0
        %829 = vmatpush.bf16.msra.mxu0 0
        %830 = vmatpush.bf16.msra.mxu0 0
        %831 = vmatpush.bf16.msra.mxu0 0
        %832 = vmatpush.bf16.msra.mxu0 %v798
        %833 = vmatpush.bf16.msra.mxu0 %v797
        %834 = vmatmul.bf16.gmra.mxu0 %v803
        %v835 = vpop.f32.mrf.mxu0
        %v836 = vadd.f32 %v787, %v835
        %v837 = vpop.f32.mrf.mxu0
        %v838 = vadd.f32 %v787, %v837
        %839 = vmatmul.bf16.gmra.mxu0 %v806
        %v840 = vpop.f32.mrf.mxu0
        %v841 = vadd.f32 %v787, %v840
        %v842 = vpop.f32.mrf.mxu0
        %v843 = vadd.f32 %v787, %v842
        %844 = vmatmul.bf16.gmra.mxu0 %v809
        %v845 = vpop.f32.mrf.mxu0
        %v846 = vadd.f32 %v787, %v845
        %v847 = vpop.f32.mrf.mxu0
        %v848 = vadd.f32 %v787, %v847
        %849 = vmatmul.bf16.gmra.mxu0 %v812
        %v850 = vpop.f32.mrf.mxu0
        %v851 = vadd.f32 %v787, %v850
        %v852 = vpop.f32.mrf.mxu0
        %v853 = vadd.f32 %v787, %v852
        %854 = vmatmul.bf16.gmra.mxu0 %v815
        %v855 = vpop.f32.mrf.mxu0
        %v856 = vadd.f32 %v787, %v855
        %v857 = vpop.f32.mrf.mxu0
        %v858 = vadd.f32 %v787, %v857
        %859 = vmatmul.bf16.gmra.mxu0 %v818
        %v860 = vpop.f32.mrf.mxu0
        %v861 = vadd.f32 %v787, %v860
        %v862 = vpop.f32.mrf.mxu0
        %v863 = vadd.f32 %v787, %v862
        %864 = vmatmul.bf16.gmra.mxu0 %v821
        %v865 = vpop.f32.mrf.mxu0
        %v866 = vadd.f32 %v787, %v865
        %v867 = vpop.f32.mrf.mxu0
        %v868 = vadd.f32 %v787, %v867
        %869 = vmatmul.bf16.gmra.mxu0 %v824
        %v870 = vpop.f32.mrf.mxu0
        %v871 = vadd.f32 %v787, %v870
        %v872 = vpop.f32.mrf.mxu0
        %v873 = vadd.f32 %v787, %v872
        %874 = vdwg.mxu0
        %875 = vst [vmem:[%s257] sm:$0xff] %v836
        %876 = vst [vmem:[%s257 + $0x8] sm:$0xff] %v838
        %877 = vst [vmem:[%s257 + $0x10] sm:$0xff] %v841
        %878 = vst [vmem:[%s257 + $0x18] sm:$0xff] %v843
        %879 = vst [vmem:[%s257 + $0x20] sm:$0xff] %v846
        %880 = vst [vmem:[%s257 + $0x28] sm:$0xff] %v848
        %881 = vst [vmem:[%s257 + $0x30] sm:$0xff] %v851
        %882 = vst [vmem:[%s257 + $0x38] sm:$0xff] %v853
        %883 = vst [vmem:[%s257 + $0x40] sm:$0xff] %v856
        %884 = vst [vmem:[%s257 + $0x48] sm:$0xff] %v858
        %885 = vst [vmem:[%s257 + $0x50] sm:$0xff] %v861
        %886 = vst [vmem:[%s257 + $0x58] sm:$0xff] %v863
        %887 = vst [vmem:[%s257 + $0x60] sm:$0xff] %v866
        %888 = vst [vmem:[%s257 + $0x68] sm:$0xff] %v868
        %889 = vst [vmem:[%s257 + $0x70] sm:$0xff] %v871
        %890 = vst [vmem:[%s257 + $0x78] sm:$0xff] %v873
        %s891 = sand.u32 %s158, 1
        %s892 = scalar_lea.sflag [#allocation4], %s891
        %s893 = sand.u32 %s158, 1
        %s894 = smul.addr %s893, 128
        %s895 = scalar_lea.vmem [#allocation3], %s894
        // Predicated region
        $region45: #{tpu_custom_call.1} parent=39 // pred_check
          %p896 = pneg %p168
        $region46: #{tpu_custom_call.1} parent=39 // pred_check_branch
          %898 = sbr.rel (%p896) target = $region48
        $region47: #{tpu_custom_call.1} parent=39 // pred_region
          %s899 = smul.u32 16, %s24
          %901 = vsyncadd %s892, 0
          %s902 = smul.addr %s23, 16
          %s903 = sadd.s32 %s899, %s902
          %s904 = smul.addr %s903, 8
          %s905 = scalar_lea.hbm %s5, %s904
          %s906 = sshll.u32 %s895, 4
          %s907 = int_to_ptr.vmem [resolvable:$true] %s906
          %s908 = sshll.u32 %s905, 4
          %s909 = int_to_ptr.hbm [resolvable:$true] %s908
          %914 = dma.vmem_to_hbm [thread:$0]  %s907, 2048, %s909, %s892, 128, 128, 8
        $region48: #{tpu_custom_call.1} parent=39 // pred_fallthru
          _
      $region40: #{tpu_custom_call.1} parent=5 // pred_fallthru
        _
      %p915 = scmp.le.s32.totalorder 2, %s14
      // Predicated region
      $region49: #{tpu_custom_call.1} parent=5 // pred_check
        %p916 = pneg %p915
      $region50: #{tpu_custom_call.1} parent=5 // pred_check_branch
        %918 = sbr.rel (%p916) target = $region52
      $region51: #{tpu_custom_call.1} parent=5 // pred_region
        %s919 = ssub.s32 %s14, 2
        // Predicated region
        $region53: #{tpu_custom_call.1} parent=51 // pred_check
          %p920 = pneg %p174
        $region54: #{tpu_custom_call.1} parent=51 // pred_check_branch
          %922 = sbr.rel (%p920) target = $region56
        $region55: #{tpu_custom_call.1} parent=51 // pred_region
          %s923 = sand.u32 %s159, 1
          %s924 = scalar_lea.sflag [#allocation4], %s923
          %s925 = sand.u32 %s159, 1
          %s926 = smul.addr %s925, 128
          %s927 = scalar_lea.vmem [#allocation3], %s926
          %929 = dma.done %s924, 2048
        $region56: #{tpu_custom_call.1} parent=51 // pred_fallthru
          _
      $region52: #{tpu_custom_call.1} parent=5 // pred_fallthru
        _
    $region6: #{tpu_custom_call.1} parent=1 // loop_footer
      %s18 = sadd.s32 1, %s14
    $region7: #{tpu_custom_call.1} parent=1 // loop_footer_branch
      %13 = sbr.rel target = $region3
    $region8: #{tpu_custom_call.1} parent=1 // loop_exit
      _
    %930 = vsyncpa [#allocation4], 1
    %s931 = scalar_lea.sflag [#allocation4], 1
    %932 = vsyncpa %s931, 1

</llo_original>
